<compile_context>
chip_gen: v7x
topology: tpu7x:2x2x1
jax: 0.10.0
libtpu: 0.0.40
codegen_flags: <defaults>
</compile_context>

<pallas_src>
import jax
import jax.numpy as jnp
from jax.experimental import pallas as pl
from jax.experimental.pallas import tpu as pltpu

_LANE = 128
# Per-block byte budget.  With default double buffering the pipeline holds
# 2 input + 2 output buffers (~4x this), i.e. ~16 MiB live: safe against the
# 32 MiB scoped limit below with headroom even on v7x (64 MiB physical VMEM).
# The measured copy roofline flattens above ~1-2 MiB blocks, so larger blocks
# buy nothing.
_BLOCK_BYTES_BUDGET = 4 * 1024 * 1024
# Hard cap for the rare "forced full-row block" case (K not sublane-aligned).
_HARD_BLOCK_BYTES_CAP = 6 * 1024 * 1024
_VMEM_LIMIT_BYTES = 32 * 1024 * 1024


def _sublane_multiple(itemsize: int) -> int:
    # Min second-to-last tile dim: 8 for 32-bit, 16 for bf16, 32 for int8/fp8.
    return max(8, 32 // max(1, itemsize))


def _largest_divisor_leq(n: int, cap: int, multiple_of: int = 1) -> int:
    """Largest d with d | n, d <= cap and d % multiple_of == 0 (0 if none)."""
    best = 0
    d = 1
    while d * d <= n:
        if n % d == 0:
            for c in (d, n // d):
                if c <= cap and c % multiple_of == 0 and c > best:
                    best = c
        d += 1
    return best


def _compiler_params(semantics):
    return pltpu.CompilerParams(
        dimension_semantics=semantics, vmem_limit_bytes=_VMEM_LIMIT_BYTES)


# --------------------------------------------------------------------------
# Kernels (pure copies; placement handled by BlockSpec index maps).
# --------------------------------------------------------------------------
def _copy_kernel(x_ref, o_ref):
    o_ref[...] = x_ref[...]


def _move_singleton_kernel(x_ref, o_ref):
    # x_ref: (1, nb, kb, 128) -> o_ref: (nb, 1, kb, 128).  Same data; only the
    # size-1 group axis moves among the leading (untiled) dims.
    o_ref[:, 0, :, :] = x_ref[0, :, :, :]


def _interleave_rows_kernel(x_ref, o_ref):
    # x_ref: (2, nb, chw) -> o_ref: (nb, 2, chw).
    o_ref[:, 0, :] = x_ref[0]
    o_ref[:, 1, :] = x_ref[1]


# --------------------------------------------------------------------------
# Wrapper
# --------------------------------------------------------------------------
def split_tuple(x: jax.Array, *, block_bytes: int = _BLOCK_BYTES_BUDGET) -> jax.Array:
    """Pallas implementation of SplitTuple.forward for NCHW input."""
    B, C, H, W = x.shape
    if B % 2 != 0:
        raise ValueError(f"SplitTuple requires an even batch size, got B={B}")
    half = B // 2
    chw = C * H * W
    itemsize = x.dtype.itemsize
    sub = _sublane_multiple(itemsize)
    budget_elems = max(1, block_bytes // itemsize)
    out_shape_4d = (half, 2 * C, H, W)

    cost = pl.CostEstimate(
        flops=0, transcendentals=0, bytes_accessed=2 * x.size * itemsize)

    # ---- Tier A: lane-dense fast path --------------------------------------
    if chw % _LANE == 0:
        K = chw // _LANE
        if chw <= budget_elems:
            kb = K                                    # full row(s) per block
            nb = _largest_divisor_leq(half, max(1, budget_elems // chw))
        else:
            nb = 1                                    # block within one row
            kb = _largest_divisor_leq(
                K, max(sub, budget_elems // _LANE), multiple_of=sub)
            if kb == 0 and chw * itemsize <= _HARD_BLOCK_BYTES_CAP:
                kb = K                                # full-extent always legal
        if kb:
            x_view = x.reshape(2, half, K, _LANE)     # free metadata reshape
            grid = (half // nb, 2, K // kb)           # batch axis leading -> megacore
            out_view = pl.pallas_call(
                _move_singleton_kernel,
                out_shape=jax.ShapeDtypeStruct((half, 2, K, _LANE), x.dtype),
                grid_spec=pltpu.PrefetchScalarGridSpec(
                    num_scalar_prefetch=0, grid=grid,
                    in_specs=[pl.BlockSpec((1, nb, kb, _LANE),
                                           lambda bi, g, ki: (g, bi, ki, 0))],
                    out_specs=pl.BlockSpec((nb, 1, kb, _LANE),
                                           lambda bi, g, ki: (bi, g, ki, 0))),
                compiler_params=_compiler_params(
                    ("parallel", "parallel", "arbitrary")),
                cost_estimate=cost,
            )(x_view)
            return out_view.reshape(out_shape_4d)
        # else: fall through to Tier C (pathological, huge non-aligned K).
    else:
        # ---- Tier B: non-lane-aligned chw, multi-row flattened blocks ------
        padded_row = pl.cdiv(chw, _LANE) * _LANE      # approx VMEM footprint/row
        nb_max = budget_elems // (2 * padded_row)
        if 1 <= half <= nb_max:
            nb = half                                 # full extent: always legal
        else:
            nb = _largest_divisor_leq(half, nb_max, multiple_of=sub)
        if nb:
            x_view = x.reshape(2, half, chw)          # free metadata reshape
            grid = (half // nb,)
            out_view = pl.pallas_call(
                _interleave_rows_kernel,
                out_shape=jax.ShapeDtypeStruct((half, 2, chw), x.dtype),
                grid_spec=pltpu.PrefetchScalarGridSpec(
                    num_scalar_prefetch=0, grid=grid,
                    in_specs=[pl.BlockSpec((2, nb, chw), lambda bi: (0, bi, 0))],
                    out_specs=pl.BlockSpec((nb, 2, chw), lambda bi: (bi, 0, 0))),
                compiler_params=_compiler_params(("parallel",)),
                cost_estimate=cost,
            )(x_view)
            return out_view.reshape(out_shape_4d)
        # else: fall through to Tier C.

    # ---- Tier C: generic safe fallback (full-extent H, W blocks) -----------
    cb = _largest_divisor_leq(C, max(1, budget_elems // (H * W))) or 1
    grid = (half, 2, C // cb)
    return pl.pallas_call(
        _copy_kernel,
        out_shape=jax.ShapeDtypeStruct(out_shape_4d, x.dtype),
        grid_spec=pltpu.PrefetchScalarGridSpec(
            num_scalar_prefetch=0, grid=grid,
            in_specs=[pl.BlockSpec((1, cb, H, W),
                                   lambda b, g, ci: (g * half + b, ci, 0, 0))],
            out_specs=pl.BlockSpec((1, cb, H, W),
                                   lambda b, g, ci: (b, g * (C // cb) + ci, 0, 0))),
        compiler_params=_compiler_params(("parallel", "parallel", "arbitrary")),
        cost_estimate=cost,
    )(x)


def _reference(x):
    half = x.shape[0] // 2
    return jnp.concatenate([x[:half], x[half:]], axis=1)


if __name__ == "__main__":
    key = jax.random.PRNGKey(0)
    k1, k2, k3 = jax.random.split(key, 3)

    # 1) Lane-dense fast path (Tier A, whole-row multi-batch blocks): chw = 1024.
    x1 = jax.random.normal(k1, (4, 4, 16, 16), dtype=jnp.float32)
    o1 = split_tuple(x1)
    jax.block_until_ready(o1)
    assert o1.shape == (2, 8, 16, 16) and o1.dtype == x1.dtype
    assert jnp.array_equal(o1, _reference(x1)), "mismatch (Tier A)"

    # 2) Non-lane-aligned chw (Tier B, flattened multi-row blocks): chw = 400.
    x2 = jax.random.normal(k2, (4, 4, 10, 10), dtype=jnp.float32)
    o2 = split_tuple(x2)
    jax.block_until_ready(o2)
    assert jnp.array_equal(o2, _reference(x2)), "mismatch (Tier B)"

    # 3) Tier A with K-blocking (forced by shrinking the block budget).
    x3 = jax.random.normal(k3, (4, 8, 16, 16), dtype=jnp.float32)
    o3 = split_tuple(x3, block_bytes=4096)
    jax.block_until_ready(o3)
    assert jnp.array_equal(o3, _reference(x3)), "mismatch (Tier A, K-blocked)"

    # 4) Generic fallback (Tier C), forced by a tiny budget on a non-aligned shape.
    o4 = split_tuple(x2, block_bytes=4096)
    jax.block_until_ready(o4)
    assert jnp.array_equal(o4, _reference(x2)), "mismatch (Tier C)"

    print("KERNEL_OK")
</pallas_src>

<mosaic_0001>
module attributes {stable_mosaic.version = 11 : i64} {
  func.func @_move_singleton_kernel(%arg0: i32, %arg1: i32, %arg2: i32, %arg3: memref<1x2x8x128xf32, #tpu.memory_space<vmem>>, %arg4: memref<2x1x8x128xf32, #tpu.memory_space<vmem>>) attributes {dimension_semantics = [#tpu.dimension_semantics<parallel>, #tpu.dimension_semantics<parallel>, #tpu.dimension_semantics<arbitrary>], iteration_bounds = array<i64: 1, 2, 1>, scalar_prefetch = 0 : i64, scratch_operands = 0 : i64, tpu.core_type = #tpu.core_type<tc>, window_params = [{transform_indices = @transform_0, window_bounds = array<i64: 1, 2, 8, 128>}, {transform_indices = @transform_1, window_bounds = array<i64: 2, 1, 8, 128>}]} {
    %c0 = arith.constant 0 : index
    %c0_0 = arith.constant 0 : index
    %c0_1 = arith.constant 0 : index
    %c0_2 = arith.constant 0 : index
    %0 = vector.load %arg3[%c0, %c0_0, %c0_1, %c0_2] : memref<1x2x8x128xf32, #tpu.memory_space<vmem>>, vector<1x2x8x128xf32>
    %1 = vector.shape_cast %0 : vector<1x2x8x128xf32> to vector<2x8x128xf32>
    %c0_3 = arith.constant 0 : index
    %c0_4 = arith.constant 0 : index
    %c0_5 = arith.constant 0 : index
    %c0_6 = arith.constant 0 : index
    %2 = vector.load %arg4[%c0_3, %c0_4, %c0_5, %c0_6] : memref<2x1x8x128xf32, #tpu.memory_space<vmem>>, vector<2x1x8x128xf32>
    %3 = vector.shape_cast %2 : vector<2x1x8x128xf32> to vector<2x8x128xf32>
    %4 = vector.shape_cast %1 : vector<2x8x128xf32> to vector<2x1x8x128xf32>
    tpu.vector_store %arg4[%c0_3, %c0_4, %c0_5, %c0_6], %4 {strides = array<i32>} : memref<2x1x8x128xf32, #tpu.memory_space<vmem>>, vector<2x1x8x128xf32>,
    return
  }
  func.func @transform_0(%arg0: i32, %arg1: i32, %arg2: i32) -> (i32, i32, i32, i32) {
    %c0_i32 = arith.constant 0 : i32
    %c0_i32_0 = arith.constant 0 : i32
    return %arg1, %arg0, %arg2, %c0_i32 : i32, i32, i32, i32
  }
  func.func @transform_1(%arg0: i32, %arg1: i32, %arg2: i32) -> (i32, i32, i32, i32) {
    %c0_i32 = arith.constant 0 : i32
    %c0_i32_0 = arith.constant 0 : i32
    return %arg0, %arg1, %arg2, %c0_i32 : i32, i32, i32, i32
  }
}

</mosaic_0001>

<llo_original>
// kernel: tpu_custom_call.1
$region0: #{tpu_custom_call.1}
  #allocation0 [shape = 'u32[]', space=smem, size = 0x4, offset = 0x4, fixed_abs, tag = 'smem constant byte address 0x4 - core index']
  #allocation1 [shape = 'u32[144,128]{1,0:T(1,128)}', space=vmem, size = 0x12000, scoped, tag = 'internal scratch']
  %s0 = inlined_call_operand.hbm [shape: f32[2,2,8,128], index: 0, kind: input, shape index: {}]
  %s1 = inlined_call_operand.hbm [shape: f32[2,2,8,128], index: 1, kind: output, shape index: {}]
  %s2 = sld [smem:[#allocation0]]
  $region41: #{tpu_custom_call.1} parent=0
    _
  %s4 = ssub.s32 1, %s2
  %s5 = scalar_select 0, %s4, %s2
  $region1: #{tpu_custom_call.1} parent=0
    #allocation2 [shape = 'u8[16384]{0}', space=vmem, size = 0x4000, scoped, tag = 'input window, operand 0']
    #allocation3 [shape = 's32[2]{0}', space=sflag, size = 0x8, scoped, tag = 'scoped memory for tpu_custom_call.1']
    #allocation4 [shape = 's32[2]{0}', space=sflag, size = 0x8, scoped, tag = 'scoped memory for tpu_custom_call.1']
    #allocation5 [shape = 'u8[16384]{0}', space=vmem, size = 0x4000, scoped, tag = 'output window, operand 0']
    %6 = vsyncpa [#allocation3], 0
    %s7 = scalar_lea.sflag [#allocation3], 1
    %8 = vsyncpa %s7, 0
    %9 = vsyncpa [#allocation4], 0
    %s10 = scalar_lea.sflag [#allocation4], 1
    %11 = vsyncpa %s10, 0
    loop: start=0, step=1, limit=4
    $region2: #{tpu_custom_call.1} parent=1 // loop_pre_header
      _
    $region3: #{tpu_custom_call.1} parent=1 // loop_header
      %s13 = sphi 0, %s17
      %p14 = scmp.ge.s32.totalorder %s13, 4
      %s20 = sphi 0, %s39
      %s21 = sphi 0, %s35
      %s22 = sphi 0, %s31
      %s23 = sphi 0, %s20
      %s24 = sphi 0, %s21
      %s25 = sphi 0, %s22
      %s26 = sphi 0, %s23
      %s27 = sphi 0, %s24
      %s28 = sphi 0, %s25
      %s46 = sphi 0, %s48
      %s49 = sphi 0, %s46
      %s50 = sphi 0, %s49
      %s66 = sphi 0, %s50
      %s76 = sphi 0, %s78
      %s79 = sphi 0, %s76
      %s80 = sphi 0, %s79
      %s96 = sphi 0, %s80
    $region4: #{tpu_custom_call.1} parent=1 // loop_header_branch
      %16 = sbr.rel (%p14) target = $region8
    $region5: #{tpu_custom_call.1} parent=1 // loop_body
      %s18 = ssub.s32 %s13, 1
      %s19 = ssub.s32 %s13, 2
      %s29 = sadd.s32 1, %s22
      %p30 = scmp.ge.s32.totalorder %s29, 1
      %s31 = scalar_select %p30, 0, %s29
      %s32 = sadd.s32 1, %s21
      %s33 = scalar_select %p30, %s32, %s21
      %p34 = scmp.ge.s32.totalorder %s33, 2
      %s35 = scalar_select %p34, 0, %s33
      %s36 = sadd.s32 1, %s20
      %s37 = scalar_select %p34, %s36, %s20
      %p38 = scmp.ge.s32.totalorder %s37, 1
      %s39 = scalar_select %p38, 0, %s37
      %s40 = ssub.s32 %s21, %s35
      %s41 = ssub.s32 %s20, %s39
      %s42 = sor.u32 %s40, %s41
      %s43 = ssub.s32 %s22, %s31
      %s44 = sor.u32 %s42, %s43
      %p45 = scmp.eq.s32.totalorder %s44, 0
      %s47 = sadd.s32 %s46, 1
      %s48 = scalar_select %p45, %s46, %s47
      %p51 = pneg %p45
      %p52 = scmp.eq.s32.totalorder %s13, 1
      %p53 = por %p51, %p52
      %p54 = scmp.ne.s32.totalorder %s46, %s49
      %p55 = scmp.eq.s32.totalorder %s13, 0
      %p56 = por %p54, %p55
      %p57 = scmp.ne.s32.totalorder %s46, %s49
      %p58 = scmp.eq.s32.totalorder %s18, 1
      %p59 = por %p57, %p58
      %p60 = scmp.ne.s32.totalorder %s49, %s50
      %p61 = scmp.eq.s32.totalorder %s18, 0
      %p62 = por %p60, %p61
      %p63 = scmp.ne.s32.totalorder %s49, %s50
      %p64 = scmp.eq.s32.totalorder %s19, 1
      %p65 = por %p63, %p64
      %p67 = scmp.ne.s32.totalorder %s50, %s66
      %p68 = scmp.eq.s32.totalorder %s19, 0
      %p69 = por %p67, %p68
      %s70 = ssub.s32 %s20, %s39
      %s71 = ssub.s32 %s21, %s35
      %s72 = sor.u32 %s70, %s71
      %s73 = ssub.s32 %s22, %s31
      %s74 = sor.u32 %s72, %s73
      %p75 = scmp.eq.s32.totalorder %s74, 0
      %s77 = sadd.s32 %s76, 1
      %s78 = scalar_select %p75, %s76, %s77
      %p81 = pneg %p75
      %p82 = scmp.eq.s32.totalorder %s13, 1
      %p83 = por %p81, %p82
      %p84 = scmp.ne.s32.totalorder %s76, %s79
      %p85 = scmp.eq.s32.totalorder %s13, 0
      %p86 = por %p84, %p85
      %p87 = scmp.ne.s32.totalorder %s76, %s79
      %p88 = scmp.eq.s32.totalorder %s18, 1
      %p89 = por %p87, %p88
      %p90 = scmp.ne.s32.totalorder %s79, %s80
      %p91 = scmp.eq.s32.totalorder %s18, 0
      %p92 = por %p90, %p91
      %p93 = scmp.ne.s32.totalorder %s79, %s80
      %p94 = scmp.eq.s32.totalorder %s19, 1
      %p95 = por %p93, %p94
      %p97 = scmp.ne.s32.totalorder %s80, %s96
      %p98 = scmp.eq.s32.totalorder %s19, 0
      %p99 = por %p97, %p98
      %p100 = scmp.le.s32.totalorder 1, %s13
      %p101 = scmp.lt.s32.totalorder %s13, 3
      %p102 = pnand %p100, %p101
      %p103 = pneg %p102
      // Predicated region
      $region9: #{tpu_custom_call.1} parent=5 // pred_check
        _
      $region10: #{tpu_custom_call.1} parent=5 // pred_check_branch
        %105 = sbr.rel (%p102) target = $region12
      $region11: #{tpu_custom_call.1} parent=5 // pred_region
        %s106 = ssub.s32 %s13, 1
      $region12: #{tpu_custom_call.1} parent=5 // pred_fallthru
        _
      %p107 = scmp.lt.s32.totalorder %s13, 2
      // Predicated region
      $region13: #{tpu_custom_call.1} parent=5 // pred_check
        %p108 = pneg %p107
      $region14: #{tpu_custom_call.1} parent=5 // pred_check_branch
        %110 = sbr.rel (%p108) target = $region16
      $region15: #{tpu_custom_call.1} parent=5 // pred_region
        // Predicated region
        $region17: #{tpu_custom_call.1} parent=15 // pred_check
          %p111 = pneg %p56
        $region18: #{tpu_custom_call.1} parent=15 // pred_check_branch
          %113 = sbr.rel (%p111) target = $region20
        $region19: #{tpu_custom_call.1} parent=15 // pred_region
          %s114 = sand.u32 %s46, 1
          %s115 = scalar_lea.sflag [#allocation3], %s114
          %s116 = sand.u32 %s46, 1
          %s117 = smul.addr %s116, 16
          %s118 = scalar_lea.vmem [#allocation2], %s117
          %s119 = smul.u32 2, %s20
          %s121 = ssub.s32 256, 256
          %122 = vsyncadd %s115, %s121
          %s123 = sadd.s32 %s22, %s119
          %s124 = smul.addr %s21, 2
          %s125 = sadd.s32 %s123, %s124
          %s126 = smul.addr %s125, 128
          %s127 = scalar_lea.hbm %s0, %s126
          %s128 = sshll.u32 %s118, 4
          %s129 = int_to_ptr.vmem [resolvable:$true] %s128
          %134 = dma.hbm_to_vmem [thread:$0]  %s127, 256, %s129, %s115, 128, 128, 8
        $region20: #{tpu_custom_call.1} parent=15 // pred_fallthru
          _
      $region16: #{tpu_custom_call.1} parent=5 // pred_fallthru
        _
      %p135 = scmp.le.s32.totalorder 1, %s13
      %p136 = scmp.lt.s32.totalorder %s13, 3
      %p137 = pnand %p135, %p136
      %p138 = pneg %p137
      // Predicated region
      $region21: #{tpu_custom_call.1} parent=5 // pred_check
        _
      $region22: #{tpu_custom_call.1} parent=5 // pred_check_branch
        %140 = sbr.rel (%p137) target = $region24
      $region23: #{tpu_custom_call.1} parent=5 // pred_region
        %s141 = ssub.s32 %s13, 1
        %s142 = sand.u32 %s49, 1
        %s143 = scalar_lea.sflag [#allocation3], %s142
        %s144 = sand.u32 %s49, 1
        %s145 = smul.addr %s144, 16
        %s146 = scalar_lea.vmem [#allocation2], %s145
        // Predicated region
        $region25: #{tpu_custom_call.1} parent=23 // pred_check
          %p147 = pneg %p62
        $region26: #{tpu_custom_call.1} parent=23 // pred_check_branch
          %149 = sbr.rel (%p147) target = $region28
        $region27: #{tpu_custom_call.1} parent=23 // pred_region
          %150 = dma.done %s143, 256
        $region28: #{tpu_custom_call.1} parent=23 // pred_fallthru
          _
        %s151 = sand.u32 %s49, 1
        %s152 = scalar_lea.sflag [#allocation3], %s151
        %s153 = sand.u32 %s49, 1
        %s154 = smul.addr %s153, 16
        %s155 = scalar_lea.vmem [#allocation2], %s154
        %p156 = pneg %p62
        %p157 = pneg %p59
        %p158 = pneg %p92
        %p159 = pneg %p89
        %s160 = sand.u32 %s79, 1
        %s161 = scalar_lea.sflag [#allocation4], %s160
        %s162 = sand.u32 %s79, 1
        %s163 = smul.addr %s162, 16
        %s164 = scalar_lea.vmem [#allocation5], %s163
        %s165 = smul.u32 2, %s23
        %s166 = smul.u32 2, %s23
        %v167 = vld [vmem:[%s146] sm:$0xff]
        %v168 = vld [vmem:[%s146 + $0x8] sm:$0xff]
        %169 = vst [vmem:[%s164] sm:$0xff] %v167
        %170 = vst [vmem:[%s164 + $0x8] sm:$0xff] %v168
        %s171 = sand.u32 %s79, 1
        %s172 = scalar_lea.sflag [#allocation4], %s171
        %s173 = sand.u32 %s79, 1
        %s174 = smul.addr %s173, 16
        %s175 = scalar_lea.vmem [#allocation5], %s174
        // Predicated region
        $region29: #{tpu_custom_call.1} parent=23 // pred_check
          %p176 = pneg %p89
        $region30: #{tpu_custom_call.1} parent=23 // pred_check_branch
          %178 = sbr.rel (%p176) target = $region32
        $region31: #{tpu_custom_call.1} parent=23 // pred_region
          %s179 = smul.u32 2, %s23
          %s181 = ssub.s32 256, 256
          %182 = vsyncadd %s172, %s181
          %s183 = sadd.s32 %s25, %s24
          %s184 = smul.addr %s179, 2
          %s185 = sadd.s32 %s183, %s184
          %s186 = smul.addr %s185, 128
          %s187 = scalar_lea.hbm %s1, %s186
          %s188 = sshll.u32 %s175, 4
          %s189 = int_to_ptr.vmem [resolvable:$true] %s188
          %194 = dma.vmem_to_hbm [thread:$0]  %s189, 256, %s187, %s172, 128, 256, 8
        $region32: #{tpu_custom_call.1} parent=23 // pred_fallthru
          _
      $region24: #{tpu_custom_call.1} parent=5 // pred_fallthru
        _
      %p195 = scmp.le.s32.totalorder 2, %s13
      // Predicated region
      $region33: #{tpu_custom_call.1} parent=5 // pred_check
        %p196 = pneg %p195
      $region34: #{tpu_custom_call.1} parent=5 // pred_check_branch
        %198 = sbr.rel (%p196) target = $region36
      $region35: #{tpu_custom_call.1} parent=5 // pred_region
        %s199 = ssub.s32 %s13, 2
        // Predicated region
        $region37: #{tpu_custom_call.1} parent=35 // pred_check
          %p200 = pneg %p95
        $region38: #{tpu_custom_call.1} parent=35 // pred_check_branch
          %202 = sbr.rel (%p200) target = $region40
        $region39: #{tpu_custom_call.1} parent=35 // pred_region
          %s203 = sand.u32 %s80, 1
          %s204 = scalar_lea.sflag [#allocation4], %s203
          %s205 = sand.u32 %s80, 1
          %s206 = smul.addr %s205, 16
          %s207 = scalar_lea.vmem [#allocation5], %s206
          %208 = dma.done %s204, 256
        $region40: #{tpu_custom_call.1} parent=35 // pred_fallthru
          _
      $region36: #{tpu_custom_call.1} parent=5 // pred_fallthru
        _
    $region6: #{tpu_custom_call.1} parent=1 // loop_footer
      %s17 = sadd.s32 1, %s13
    $region7: #{tpu_custom_call.1} parent=1 // loop_footer_branch
      %12 = sbr.rel target = $region3
    $region8: #{tpu_custom_call.1} parent=1 // loop_exit
      _
    %209 = vsyncpa [#allocation3], 1
    %s210 = scalar_lea.sflag [#allocation3], 1
    %211 = vsyncpa %s210, 1
    %212 = vsyncpa [#allocation4], 1
    %s213 = scalar_lea.sflag [#allocation4], 1
    %214 = vsyncpa %s213, 1

</llo_original>
